<compile_context>
chip_gen: v7x
topology: tpu7x:2x2x1
jax: 0.10.0
libtpu: 0.0.40
codegen_flags: <defaults>
</compile_context>

<pallas_src>
import jax
import jax.numpy as jnp
from jax.experimental import pallas as pl
from jax.experimental.pallas import tpu as pltpu

_LANES = 128
_MAX_BLOCK_ROWS = 4096          # 4096 x 128 f32 = 2 MiB per tile
_MIN_PALLAS_ELEMS = 1024        # below one f32 vreg -> plain XLA clip


def _relu30_kernel(x_ref, o_ref):
    x = x_ref[...]
    # torch.min(torch.max(0, x), 30) == clamp(x, 0, 30); dtype follows x.
    lo = jnp.zeros((), dtype=x.dtype)
    hi = jnp.asarray(30, dtype=x.dtype)
    o_ref[...] = jnp.minimum(jnp.maximum(lo, x), hi)


def relu30(x):
    """Elementwise clamp of x to [0, 30], matching the PyTorch relu30 module."""
    n = x.size
    if n == 0:
        return x
    if n < _MIN_PALLAS_ELEMS:
        # Dispatch/grid-step overhead would dwarf the work; let XLA fuse it.
        return jnp.clip(x, jnp.zeros((), x.dtype), jnp.asarray(30, x.dtype))

    dtype = x.dtype
    itemsize = jnp.dtype(dtype).itemsize
    # Sublane packing: 8 rows for 32-bit, 16 for bf16/fp16, 32 for int8/fp8.
    sublane = {4: 8, 2: 16, 1: 32}.get(itemsize, 8)

    # Flatten to a lane-dense (rows, 128) view.
    rows = pl.cdiv(n, _LANES)
    rows = ((rows + sublane - 1) // sublane) * sublane
    block_rows = min(_MAX_BLOCK_ROWS, rows)
    # Make the grid divide evenly so every block is full (no ragged tiles).
    rows = ((rows + block_rows - 1) // block_rows) * block_rows
    padded = rows * _LANES

    flat = x.reshape(-1)
    if padded != n:
        flat = jnp.pad(flat, (0, padded - n))
    x2d = flat.reshape(rows, _LANES)

    out2d = pl.pallas_call(
        _relu30_kernel,
        out_shape=jax.ShapeDtypeStruct((rows, _LANES), dtype),
        grid=(rows // block_rows,),
        in_specs=[pl.BlockSpec((block_rows, _LANES), lambda i: (i, 0))],
        out_specs=pl.BlockSpec((block_rows, _LANES), lambda i: (i, 0)),
        compiler_params=pltpu.CompilerParams(
            dimension_semantics=("parallel",),
            vmem_limit_bytes=32 * 1024 * 1024,
        ),
    )(x2d)

    out_flat = out2d.reshape(-1)
    if padded != n:
        out_flat = out_flat[:n]
    return out_flat.reshape(x.shape)


if __name__ == "__main__":
    key = jax.random.PRNGKey(0)
    # Small NCHW-style input; values spread so some fall below 0 and above 30.
    x = jax.random.normal(key, (2, 4, 16, 16), dtype=jnp.float32) * 25.0

    out = relu30(x)
    out = jax.block_until_ready(out)

    # Reference check in plain JAX.
    ref = jnp.clip(x, 0.0, 30.0)
    assert out.shape == x.shape and out.dtype == x.dtype
    assert jnp.max(jnp.abs(out - ref)) == 0.0

    # Also exercise a larger, multi-tile case to validate the tiled path.
    key2 = jax.random.PRNGKey(1)
    y = jax.random.normal(key2, (3, 7, 123, 130), dtype=jnp.float32) * 40.0
    out_y = jax.block_until_ready(relu30(y))
    ref_y = jnp.clip(y, 0.0, 30.0)
    assert out_y.shape == y.shape and out_y.dtype == y.dtype
    assert jnp.max(jnp.abs(out_y - ref_y)) == 0.0

    print("KERNEL_OK")
</pallas_src>

<mosaic_0001>
module attributes {stable_mosaic.version = 11 : i64} {
  func.func @_relu30_kernel(%arg0: i32, %arg1: memref<16x128xf32, #tpu.memory_space<vmem>>, %arg2: memref<16x128xf32, #tpu.memory_space<vmem>>) attributes {dimension_semantics = [#tpu.dimension_semantics<parallel>], iteration_bounds = array<i64: 1>, scalar_prefetch = 0 : i64, scratch_operands = 0 : i64, tpu.core_type = #tpu.core_type<tc>, window_params = [{transform_indices = @transform_0, window_bounds = array<i64: 16, 128>}, {transform_indices = @transform_1, window_bounds = array<i64: 16, 128>}]} {
    %c0 = arith.constant 0 : index
    %c0_0 = arith.constant 0 : index
    %0 = vector.load %arg1[%c0, %c0_0] : memref<16x128xf32, #tpu.memory_space<vmem>>, vector<16x128xf32>
    %cst = arith.constant 0.000000e+00 : f32
    %1 = vector.broadcast %cst : f32 to vector<16x128xf32>
    %2 = arith.maximumf %1, %0 : vector<16x128xf32>
    %cst_1 = arith.constant 3.000000e+01 : f32
    %3 = vector.broadcast %cst_1 : f32 to vector<16x128xf32>
    %4 = arith.minimumf %2, %3 : vector<16x128xf32>
    %c0_2 = arith.constant 0 : index
    %c0_3 = arith.constant 0 : index
    %5 = vector.load %arg2[%c0_2, %c0_3] : memref<16x128xf32, #tpu.memory_space<vmem>>, vector<16x128xf32>
    tpu.vector_store %arg2[%c0_2, %c0_3], %4 {strides = array<i32>} : memref<16x128xf32, #tpu.memory_space<vmem>>, vector<16x128xf32>,
    return
  }
  func.func @transform_0(%arg0: i32) -> (i32, i32) {
    %c0_i32 = arith.constant 0 : i32
    %c0_i32_0 = arith.constant 0 : i32
    return %arg0, %c0_i32 : i32, i32
  }
  func.func @transform_1(%arg0: i32) -> (i32, i32) {
    %c0_i32 = arith.constant 0 : i32
    %c0_i32_0 = arith.constant 0 : i32
    return %arg0, %c0_i32 : i32, i32
  }
}

</mosaic_0001>

<llo_original>
// kernel: tpu_custom_call.1
$region0: #{tpu_custom_call.1}
  #allocation0 [shape = 'u32[]', space=smem, size = 0x4, offset = 0x4, fixed_abs, tag = 'smem constant byte address 0x4 - core index']
  #allocation1 [shape = 'u32[144,128]{1,0:T(1,128)}', space=vmem, size = 0x12000, scoped, tag = 'internal scratch']
  %s0 = inlined_call_operand.hbm [shape: f32[16,128], index: 0, kind: input, shape index: {}]
  %s1 = inlined_call_operand.hbm [shape: f32[16,128], index: 1, kind: output, shape index: {}]
  %s2 = sld [smem:[#allocation0]]
  $region18: #{tpu_custom_call.1} parent=0
    _
  %s4 = ssub.s32 1, %s2
  %s5 = scalar_select 0, %s4, %s2
  $region1: #{tpu_custom_call.1} parent=0
    #allocation2 [shape = 'u8[8192]{0}', space=vmem, size = 0x2000, scoped, tag = 'input window, operand 0, single buffered']
    #allocation3 [shape = 's32[1]{0}', space=sflag, size = 0x4, scoped, tag = 'scoped memory for tpu_custom_call.1']
    #allocation4 [shape = 's32[1]{0}', space=sflag, size = 0x4, scoped, tag = 'scoped memory for tpu_custom_call.1']
    #allocation5 [shape = 'u8[8192]{0}', space=vmem, size = 0x2000, scoped, tag = 'output window, operand 0, single buffered']
    %6 = vsyncpa [#allocation3], 0
    %7 = vsyncpa [#allocation4], 0
    // Predicated region
    $region2: #{tpu_custom_call.1} parent=1 // pred_check
      _
    $region3: #{tpu_custom_call.1} parent=1 // pred_check_branch
      %9 = sbr.rel (0) target = $region5
    $region4: #{tpu_custom_call.1} parent=1 // pred_region
      %s11 = ssub.s32 256, 256
      %12 = vsyncadd [#allocation3], %s11
      %s13 = sshll.u32 [#allocation2], 4
      %s14 = int_to_ptr.vmem [resolvable:$true] %s13
      %19 = dma.hbm_to_vmem [thread:$0]  %s0, 256, %s14, [#allocation3], 128, 128, 8
    $region5: #{tpu_custom_call.1} parent=1 // pred_fallthru
      _
    // Predicated region
    $region6: #{tpu_custom_call.1} parent=1 // pred_check
      _
    $region7: #{tpu_custom_call.1} parent=1 // pred_check_branch
      %21 = sbr.rel (0) target = $region9
    $region8: #{tpu_custom_call.1} parent=1 // pred_region
      %22 = dma.done [#allocation3], 256
    $region9: #{tpu_custom_call.1} parent=1 // pred_fallthru
      _
    %v23 = vld [vmem:[#allocation2] sm:$0xff]
    %v24 = vld [vmem:[#allocation2 + $0x8] sm:$0xff]
    %v25 = vmax.f32 %v23, 0.0
    %v26 = vmax.f32 %v24, 0.0
    %v27 = vmin.f32 %v25, 30.0
    %v28 = vmin.f32 %v26, 30.0
    %29 = vst [vmem:[#allocation5] sm:$0xff] %v27
    %30 = vst [vmem:[#allocation5 + $0x8] sm:$0xff] %v28
    // Predicated region
    $region10: #{tpu_custom_call.1} parent=1 // pred_check
      _
    $region11: #{tpu_custom_call.1} parent=1 // pred_check_branch
      %32 = sbr.rel (0) target = $region13
    $region12: #{tpu_custom_call.1} parent=1 // pred_region
      %s34 = ssub.s32 256, 256
      %35 = vsyncadd [#allocation4], %s34
      %s36 = sshll.u32 [#allocation5], 4
      %s37 = int_to_ptr.vmem [resolvable:$true] %s36
      %42 = dma.vmem_to_hbm [thread:$0]  %s37, 256, %s1, [#allocation4], 128, 128, 8
    $region13: #{tpu_custom_call.1} parent=1 // pred_fallthru
      _
    // Predicated region
    $region14: #{tpu_custom_call.1} parent=1 // pred_check
      _
    $region15: #{tpu_custom_call.1} parent=1 // pred_check_branch
      %44 = sbr.rel (0) target = $region17
    $region16: #{tpu_custom_call.1} parent=1 // pred_region
      %45 = dma.done [#allocation4], 256
    $region17: #{tpu_custom_call.1} parent=1 // pred_fallthru
      _
    %46 = vsyncpa [#allocation3], 1
    %47 = vsyncpa [#allocation4], 1

</llo_original>
